<compile_context>
chip_gen: v6e
topology: v6e:2x2x1
jax: 0.10.0
libtpu: 0.0.40
codegen_flags: <defaults>
</compile_context>

<pallas_src>
import functools

import jax
import jax.numpy as jnp
import numpy as np
from jax.experimental import pallas as pl
from jax.experimental.pallas import tpu as pltpu

KH = KW = 7
CONV_STRIDE = 2
CONV_PAD = 3
BN_EPS = 1e-5
NTAP = KW + 2          # 9 x-columns cover one (even, odd) conv-output column pair


def _stem_kernel(p_ref, w_ref, o_ref, *, TP, WPp, Cout, WO,
                 mask_odd_col, mask_wrap, precision):
    """One (batch, pooled-row tile) step: conv-as-GEMM (+folded BN bias) + ReLU
    + fused 3x3/s2/p1 max-pool, stored lane-dense (two pooled cols / 128 lanes)."""
    R = 2 * TP + 1                       # conv rows in this tile (incl. top halo row)
    K = p_ref.shape[-1]
    WQ = WPp // 2

    # One GEMM: LHS rows are (conv-row, column-pair) tap windows, RHS columns
    # 0:Cout are even-column weights, Cout:2*Cout odd-column weights; the last
    # two taps carry the folded-BN bias (so padded positions come out exactly 0).
    xm = p_ref[0].reshape(R * WPp, K)
    y = jnp.dot(xm, w_ref[...], preferred_element_type=jnp.float32,
                precision=precision)
    y = jnp.maximum(y, 0.0).reshape(R, WPp, 2 * Cout)      # ReLU (bias already in)

    e = y[:, :, :Cout]                   # conv col 2*wp
    o = y[:, :, Cout:]                   # conv col 2*wp + 1
    if mask_odd_col or mask_wrap:
        wp_ids = jax.lax.broadcasted_iota(jnp.int32, (1, WPp, 1), 1)
    if mask_odd_col:                     # WO odd: conv col WO is pool padding
        o = jnp.where(2 * wp_ids + 1 < WO, o, 0.0)
    o_prev = pltpu.roll(o, shift=1, axis=1)                # conv col 2*wp - 1
    if mask_wrap:                        # wrapped-around column may hold real data
        o_prev = jnp.where(wp_ids == 0, 0.0, o_prev)
    cm = jnp.maximum(jnp.maximum(e, o), o_prev)            # column max (R, WPp, Cout)

    # pooled row h <- cm rows {2h, 2h+1, 2h+2}   (row 0 is the tile's top halo)
    a = cm[0:2 * TP].reshape(TP, 2, WPp, Cout)
    b = cm[1:2 * TP + 1].reshape(TP, 2, WPp, Cout)
    pooled = jnp.maximum(jnp.maximum(a[:, 0], a[:, 1]), b[:, 1])   # (TP, WPp, Cout)

    # lane-dense store: pooled cols (q, q + WQ) share one 128-lane row
    o_ref[0] = jnp.concatenate([pooled[:, :WQ, :], pooled[:, WQ:, :]],
                               axis=-1).astype(o_ref.dtype)


def _extract_patches(x_nhwc, HO, WO, HOP, WPp, dtype):
    """im2col for the 7x7/s2/p3 conv, one row per (conv-row, column-pair).

    Returns (N, HOP, WPp, KH*NTAP*Cin + 2) with
      out[n, ho, wp, (kh*NTAP + j)*Cin + c] = x_pad[n, 2*ho + kh, 4*wp + j, c]
    so taps j=0..6 drive conv col 2*wp and taps j=2..8 drive conv col 2*wp+1.
    Rows ho >= HO are zeroed (they act as max-pool padding).  The trailing two
    taps are 1.0 iff the (row, even col) / (row, odd col) position is a real
    conv output; they carry the folded-BN bias inside the GEMM.
    """
    N, H, W, Cin = x_nhwc.shape
    x = x_nhwc.astype(dtype)
    bot = max(0, 2 * HOP + 2 - H)
    right = max(0, 4 * WPp + 2 - W)
    xp = jnp.pad(x, ((0, 0), (CONV_PAD, bot), (CONV_PAD, right), (0, 0)))
    taps = []
    for kh in range(KH):
        rows = xp[:, kh:kh + 2 * HOP:2]                       # (N, HOP, Wpad, Cin)
        for j in range(NTAP):
            taps.append(rows[:, :, j:j + 4 * WPp:4, :])       # (N, HOP, WPp, Cin)
    p = jnp.concatenate(taps, axis=-1)                        # (N, HOP, WPp, 63*Cin)

    row_ok = jnp.arange(HOP) < HO
    p = p * row_ok[None, :, None, None].astype(dtype)
    even_ok = 2 * jnp.arange(WPp) < WO
    odd_ok = 2 * jnp.arange(WPp) + 1 < WO
    bias_taps = jnp.stack(
        [row_ok[:, None] & even_ok[None, :], row_ok[:, None] & odd_ok[None, :]],
        axis=-1).astype(dtype)                                # (HOP, WPp, 2)
    bias_taps = jnp.broadcast_to(bias_taps[None], (N, HOP, WPp, 2))
    return jnp.concatenate([p, bias_taps], axis=-1)           # (N, HOP, WPp, K2p)


def _pack_weights(weight_oihw, scale, bias, dtype):
    """(191, 2*Cout) GEMM RHS: even/odd column-parity weights + 2 bias rows."""
    Cout, Cin = weight_oihw.shape[0], weight_oihw.shape[1]
    w = weight_oihw.astype(jnp.float32) * scale[:, None, None, None]
    w = jnp.transpose(w, (2, 3, 1, 0))                         # (KH, KW, Cin, Cout)
    z2 = jnp.zeros((KH, 2, Cin, Cout), jnp.float32)
    w_even = jnp.concatenate([w, z2], axis=1)                  # taps j=0..8, even col
    w_odd = jnp.concatenate([z2, w], axis=1)                   # taps j=0..8, odd col
    w_mat = jnp.concatenate([w_even, w_odd], axis=-1).reshape(
        KH * NTAP * Cin, 2 * Cout)
    zb = jnp.zeros((Cout,), jnp.float32)
    bias_rows = jnp.stack([jnp.concatenate([bias, zb]),
                           jnp.concatenate([zb, bias])], axis=0)
    return jnp.concatenate([w_mat, bias_rows], axis=0).astype(dtype)


def _choose_tile(HP, N, max_tp):
    """Divisor of HP (no padded pooled rows), preferring an even N*n_tiles (v7x)."""
    max_tp = max(1, min(max_tp, HP))
    divisors = [d for d in range(1, max_tp + 1) if HP % d == 0]

    def score(d):
        nt = HP // d
        return (N * nt >= 2, (N * nt) % 2 == 0, d)

    tp = max(divisors, key=score)
    if tp * 4 < max_tp:         # HP awkward (e.g. large prime): accept some padding
        tp = max_tp
    return tp


def psr_basic_stem_forward(x_nchw, weight_oihw, bn_gamma, bn_beta, bn_mean, bn_var,
                           *, eps=BN_EPS, mxu_dtype=jnp.bfloat16,
                           tile_pooled_rows=16):
    N, Cin, H, W = x_nchw.shape
    Cout = weight_oihw.shape[0]

    # conv(7x7, s2, p3) and maxpool(3x3, s2, p1) output sizes
    HO = (H + 2 * CONV_PAD - KH) // CONV_STRIDE + 1
    WO = (W + 2 * CONV_PAD - KW) // CONV_STRIDE + 1
    HP = (HO - 1) // 2 + 1
    WP = (WO - 1) // 2 + 1

    WPp = ((WP + 7) // 8) * 8            # column pairs, sublane aligned
    WQ = WPp // 2
    TP = _choose_tile(HP, N, tile_pooled_rows)
    n_tiles = pl.cdiv(HP, TP)
    HP_k = n_tiles * TP
    HOP = 2 * HP_k
    TB = 2 * TP
    K2p = KH * NTAP * Cin + 2

    # wrapper-side im2col, already in the MXU dtype
    x = jnp.transpose(x_nchw, (0, 2, 3, 1))
    p = _extract_patches(x, HO, WO, HOP, WPp, mxu_dtype)      # (N, HOP, WPp, K2p)
    # prepend the all-zero conv row -1 (top pool padding) and lay rows out per
    # tile with the 1-row halo folded in: tile i owns conv rows TB*i-1..TB*i+TB-1
    p = jnp.concatenate([jnp.zeros_like(p[:, :1]), p], axis=1)
    if n_tiles > 1:
        idx = (np.arange(n_tiles, dtype=np.int32)[:, None] * TB
               + np.arange(TB + 1, dtype=np.int32)[None, :]).reshape(-1)
        p = jnp.take(p, jnp.asarray(idx), axis=1)             # (N, n_tiles*(TB+1), WPp, K2p)

    # fold BN into the GEMM (scale into weights, shift via the bias taps)
    scale = (bn_gamma / jnp.sqrt(bn_var + eps)).astype(jnp.float32)
    bias = (bn_beta - bn_mean * scale).astype(jnp.float32)
    w_mat = _pack_weights(weight_oihw, scale, bias, mxu_dtype)  # (K2p, 2*Cout)

    precision = (jax.lax.Precision.HIGHEST
                 if jnp.dtype(mxu_dtype) == jnp.dtype(jnp.float32) else None)
    mask_odd_col = (WO % 2 == 1)                    # conv col WO is pool padding
    mask_wrap = not (mask_odd_col or (4 * WPp - 5 >= W))

    kernel = functools.partial(_stem_kernel, TP=TP, WPp=WPp, Cout=Cout, WO=WO,
                               mask_odd_col=mask_odd_col, mask_wrap=mask_wrap,
                               precision=precision)

    flops = 2 * N * n_tiles * (TB + 1) * WPp * K2p * (2 * Cout)
    bytes_accessed = (p.size * p.dtype.itemsize
                      + w_mat.size * w_mat.dtype.itemsize
                      + N * HP_k * WQ * 2 * Cout * 4)

    pooled = pl.pallas_call(
        kernel,
        out_shape=jax.ShapeDtypeStruct((N, HP_k, WQ, 2 * Cout), jnp.float32),
        grid_spec=pltpu.PrefetchScalarGridSpec(
            num_scalar_prefetch=0,
            grid=(N, n_tiles),
            in_specs=[
                pl.BlockSpec((1, TB + 1, WPp, K2p), lambda n, i: (n, i, 0, 0)),
                pl.BlockSpec((K2p, 2 * Cout), lambda n, i: (0, 0)),
            ],
            out_specs=pl.BlockSpec((1, TP, WQ, 2 * Cout), lambda n, i: (n, i, 0, 0)),
        ),
        compiler_params=pltpu.CompilerParams(
            dimension_semantics=("parallel", "parallel")),
        cost_estimate=pl.CostEstimate(flops=flops, transcendentals=0,
                                      bytes_accessed=bytes_accessed),
    )(p, w_mat)

    # unpack the lane packing: [.., q, 0:Cout] = pooled col q, [.., q, Cout:] = q+WQ
    out = jnp.concatenate([pooled[..., :Cout], pooled[..., Cout:]], axis=2)
    out = out[:, :HP, :WP]
    return jnp.transpose(out, (0, 3, 1, 2))                   # NCHW


def _reference(x_nchw, weight_oihw, gamma, beta, mean, var, eps=BN_EPS):
    y = jax.lax.conv_general_dilated(
        x_nchw, weight_oihw, window_strides=(2, 2),
        padding=((CONV_PAD, CONV_PAD), (CONV_PAD, CONV_PAD)),
        dimension_numbers=("NCHW", "OIHW", "NCHW"),
        precision=jax.lax.Precision.HIGHEST)
    scale = gamma / jnp.sqrt(var + eps)
    shift = beta - mean * scale
    y = y * scale[None, :, None, None] + shift[None, :, None, None]
    y = jnp.maximum(y, 0.0)
    y = jax.lax.reduce_window(y, -jnp.inf, jax.lax.max,
                              window_dimensions=(1, 1, 3, 3),
                              window_strides=(1, 1, 2, 2),
                              padding=((0, 0), (0, 0), (1, 1), (1, 1)))
    return y


if __name__ == "__main__":
    base_key = jax.random.PRNGKey(0)

    def run_case(case_id, N, Cin, H, W, Cout, mxu_dtype, tol, tile_pooled_rows=16):
        k1, k2, k3, k4, k5, k6 = jax.random.split(
            jax.random.fold_in(base_key, case_id), 6)
        x = jax.random.normal(k1, (N, Cin, H, W), jnp.float32)
        # c2_msra_fill: kaiming_normal, fan_out, relu -> std = sqrt(2/(Cout*KH*KW))
        w = jax.random.normal(k2, (Cout, Cin, KH, KW), jnp.float32) * jnp.sqrt(
            2.0 / (Cout * KH * KW))
        gamma = 1.0 + 0.1 * jax.random.normal(k3, (Cout,), jnp.float32)
        beta = 0.1 * jax.random.normal(k4, (Cout,), jnp.float32)
        mean = 0.1 * jax.random.normal(k5, (Cout,), jnp.float32)
        var = 0.5 + jax.random.uniform(k6, (Cout,), jnp.float32)

        fwd = jax.jit(functools.partial(psr_basic_stem_forward,
                                        mxu_dtype=mxu_dtype,
                                        tile_pooled_rows=tile_pooled_rows))
        out = jax.block_until_ready(fwd(x, w, gamma, beta, mean, var))
        ref = _reference(x, w, gamma, beta, mean, var)
        assert out.shape == ref.shape, (out.shape, ref.shape)
        err = float(jnp.max(jnp.abs(out - ref)))
        assert jnp.allclose(out, ref, rtol=tol, atol=tol), err

    # default bf16 MXU operands (v6e/v7x), f32 accumulation/epilogue
    run_case(0, 2, 3, 16, 16, 64, jnp.bfloat16, 3e-2)
    # exact f32 path
    run_case(1, 2, 3, 16, 16, 64, jnp.float32, 2e-3)
    # odd conv output sizes + multi row-tile (halo fold, odd-column mask, slicing)
    run_case(2, 1, 3, 34, 30, 64, jnp.float32, 2e-3, tile_pooled_rows=4)
    # even WO with no spare right padding (exercises the roll wrap-around mask)
    run_case(3, 1, 3, 32, 32, 64, jnp.float32, 2e-3)

    print("KERNEL_OK")
</pallas_src>

<mosaic_0001>
module attributes {stable_mosaic.version = 11 : i64} {
  func.func @_stem_kernel(%arg0: i32, %arg1: i32, %arg2: memref<1x9x8x191xbf16, #tpu.memory_space<vmem>>, %arg3: memref<191x128xbf16, #tpu.memory_space<vmem>>, %arg4: memref<1x4x4x128xf32, #tpu.memory_space<vmem>>) attributes {dimension_semantics = [#tpu.dimension_semantics<parallel>, #tpu.dimension_semantics<parallel>], iteration_bounds = array<i64: 2, 1>, scalar_prefetch = 0 : i64, scratch_operands = 0 : i64, tpu.core_type = #tpu.core_type<tc>, window_params = [{transform_indices = @transform_0, window_bounds = array<i64: 1, 9, 8, 191>}, {pipeline_mode = #tpu.pipeline_mode<synchronous>, transform_indices = @transform_1, window_bounds = array<i64: 191, 128>}, {transform_indices = @transform_2, window_bounds = array<i64: 1, 4, 4, 128>}]} {
    %c0 = arith.constant 0 : index
    %c0_0 = arith.constant 0 : index
    %c0_1 = arith.constant 0 : index
    %c0_2 = arith.constant 0 : index
    %0 = vector.load %arg2[%c0, %c0_0, %c0_1, %c0_2] : memref<1x9x8x191xbf16, #tpu.memory_space<vmem>>, vector<1x9x8x191xbf16>
    %1 = vector.shape_cast %0 : vector<1x9x8x191xbf16> to vector<9x8x191xbf16>
    %2 = vector.shape_cast %1 : vector<9x8x191xbf16> to vector<72x191xbf16>
    %c0_3 = arith.constant 0 : index
    %c0_4 = arith.constant 0 : index
    %3 = vector.load %arg3[%c0_3, %c0_4] : memref<191x128xbf16, #tpu.memory_space<vmem>>, vector<191x128xbf16>
    %cst = arith.constant dense<0.000000e+00> : vector<72x128xf32>
    %4 = tpu.matmul %2, %3, %cst {dimension_numbers = #tpu.dot_dimension_numbers<[1], [0], [0], [1], [0, 0, 1, 1], [], []>} : vector<72x191xbf16>, vector<191x128xbf16>, vector<72x128xf32> -> vector<72x128xf32>
    %cst_5 = arith.constant 0.000000e+00 : f32
    %5 = vector.broadcast %cst_5 : f32 to vector<72x128xf32>
    %6 = arith.maximumf %4, %5 : vector<72x128xf32>
    %7 = vector.shape_cast %6 : vector<72x128xf32> to vector<9x8x128xf32>
    %8 = vector.extract_strided_slice %7 {offsets = [0, 0, 0], sizes = [9, 8, 64], strides = [1, 1, 1]} : vector<9x8x128xf32> to vector<9x8x64xf32>
    %9 = vector.extract_strided_slice %7 {offsets = [0, 0, 64], sizes = [9, 8, 64], strides = [1, 1, 1]} : vector<9x8x128xf32> to vector<9x8x64xf32>
    %c1_i32 = arith.constant 1 : i32
    %10 = tpu.dynamic_rotate %9 by %c1_i32 dim 1 : vector<9x8x64xf32>, i32 -> vector<9x8x64xf32>
    %11 = arith.maximumf %8, %9 : vector<9x8x64xf32>
    %12 = arith.maximumf %11, %10 : vector<9x8x64xf32>
    %13 = vector.extract_strided_slice %12 {offsets = [0, 0, 0], sizes = [8, 8, 64], strides = [1, 1, 1]} : vector<9x8x64xf32> to vector<8x8x64xf32>
    %14 = vector.shape_cast %13 : vector<8x8x64xf32> to vector<4x2x8x64xf32>
    %15 = vector.extract_strided_slice %12 {offsets = [1, 0, 0], sizes = [8, 8, 64], strides = [1, 1, 1]} : vector<9x8x64xf32> to vector<8x8x64xf32>
    %16 = vector.shape_cast %15 : vector<8x8x64xf32> to vector<4x2x8x64xf32>
    %17 = vector.extract_strided_slice %14 {offsets = [0, 0, 0, 0], sizes = [4, 1, 8, 64], strides = [1, 1, 1, 1]} : vector<4x2x8x64xf32> to vector<4x1x8x64xf32>
    %18 = vector.shape_cast %17 : vector<4x1x8x64xf32> to vector<4x8x64xf32>
    %19 = vector.extract_strided_slice %14 {offsets = [0, 1, 0, 0], sizes = [4, 1, 8, 64], strides = [1, 1, 1, 1]} : vector<4x2x8x64xf32> to vector<4x1x8x64xf32>
    %20 = vector.shape_cast %19 : vector<4x1x8x64xf32> to vector<4x8x64xf32>
    %21 = arith.maximumf %18, %20 : vector<4x8x64xf32>
    %22 = vector.extract_strided_slice %16 {offsets = [0, 1, 0, 0], sizes = [4, 1, 8, 64], strides = [1, 1, 1, 1]} : vector<4x2x8x64xf32> to vector<4x1x8x64xf32>
    %23 = vector.shape_cast %22 : vector<4x1x8x64xf32> to vector<4x8x64xf32>
    %24 = arith.maximumf %21, %23 : vector<4x8x64xf32>
    %25 = vector.extract_strided_slice %24 {offsets = [0, 0, 0], sizes = [4, 4, 64], strides = [1, 1, 1]} : vector<4x8x64xf32> to vector<4x4x64xf32>
    %26 = vector.extract_strided_slice %24 {offsets = [0, 4, 0], sizes = [4, 4, 64], strides = [1, 1, 1]} : vector<4x8x64xf32> to vector<4x4x64xf32>
    %27 = tpu.concatenate %25, %26 in 2 : vector<4x4x64xf32>, vector<4x4x64xf32> -> vector<4x4x128xf32>
    %c0_6 = arith.constant 0 : index
    %c0_7 = arith.constant 0 : index
    %c0_8 = arith.constant 0 : index
    %c0_9 = arith.constant 0 : index
    %28 = vector.load %arg4[%c0_6, %c0_7, %c0_8, %c0_9] : memref<1x4x4x128xf32, #tpu.memory_space<vmem>>, vector<1x4x4x128xf32>
    %29 = vector.shape_cast %28 : vector<1x4x4x128xf32> to vector<4x4x128xf32>
    %30 = vector.shape_cast %27 : vector<4x4x128xf32> to vector<1x4x4x128xf32>
    tpu.vector_store %arg4[%c0_6, %c0_7, %c0_8, %c0_9], %30 {strides = array<i32>} : memref<1x4x4x128xf32, #tpu.memory_space<vmem>>, vector<1x4x4x128xf32>,
    return
  }
  func.func @transform_0(%arg0: i32, %arg1: i32) -> (i32, i32, i32, i32) {
    %c0_i32 = arith.constant 0 : i32
    %c0_i32_0 = arith.constant 0 : i32
    %c0_i32_1 = arith.constant 0 : i32
    return %arg0, %arg1, %c0_i32, %c0_i32_0 : i32, i32, i32, i32
  }
  func.func @transform_1(%arg0: i32, %arg1: i32) -> (i32, i32) {
    %c0_i32 = arith.constant 0 : i32
    %c0_i32_0 = arith.constant 0 : i32
    %c0_i32_1 = arith.constant 0 : i32
    return %c0_i32, %c0_i32_0 : i32, i32
  }
  func.func @transform_2(%arg0: i32, %arg1: i32) -> (i32, i32, i32, i32) {
    %c0_i32 = arith.constant 0 : i32
    %c0_i32_0 = arith.constant 0 : i32
    %c0_i32_1 = arith.constant 0 : i32
    return %arg0, %arg1, %c0_i32, %c0_i32_0 : i32, i32, i32, i32
  }
}

</mosaic_0001>

<llo_original>
// kernel: psr_basic_stem_forward.1
$region0: #{psr_basic_stem_forward.1}
  #allocation0 [shape = 'u32[]', space=smem, size = 0x4, offset = 0x4, fixed_abs, tag = 'smem constant byte address 0x4 - core index']
  #allocation1 [shape = 'u32[144,128]{1,0:T(1,128)}', space=vmem, size = 0x12000, scoped, tag = 'internal scratch']
  %s0 = inlined_call_operand.vmem [shape: bf16[2,9,8,191], index: 0, kind: input, shape index: {}]
  %s1 = inlined_call_operand.vmem [shape: bf16[191,128], index: 1, kind: input, shape index: {}]
  %s2 = inlined_call_operand.vmem [shape: f32[2,4,4,128], index: 2, kind: output, shape index: {}]
  %s3 = sld [smem:[#allocation0]]
  $region41: #{psr_basic_stem_forward.1} parent=0
    _
  %s5 = ssub.s32 1, %s3
  %s6 = scalar_select 0, %s5, %s3
  loop: start=0, step=1, limit=4
  $region2: #{psr_basic_stem_forward.1} parent=0 // loop_pre_header
    _
  $region3: #{psr_basic_stem_forward.1} parent=0 // loop_header
    %s8 = sphi 0, %s12
    %p9 = scmp.ge.s32.totalorder %s8, 4
    %s15 = sphi 0, %s27
    %s16 = sphi 0, %s23
    %s17 = sphi 0, %s15
    %s18 = sphi 0, %s16
    %s19 = sphi 0, %s17
    %s20 = sphi 0, %s18
    %s32 = sphi 0, %s34
    %s35 = sphi 0, %s32
    %s36 = sphi 0, %s35
    %s52 = sphi 0, %s36
    %s56 = sphi 0, %s56
    %s58 = sphi 0, %s56
    %s59 = sphi 0, %s58
    %s73 = sphi 0, %s59
    %s81 = sphi 0, %s83
    %s84 = sphi 0, %s81
    %s85 = sphi 0, %s84
    %s101 = sphi 0, %s85
  $region4: #{psr_basic_stem_forward.1} parent=0 // loop_header_branch
    %11 = sbr.rel (%p9) target = $region8
  $region5: #{psr_basic_stem_forward.1} parent=0 // loop_body
    %s13 = ssub.s32 %s8, 1
    %s14 = ssub.s32 %s8, 2
    %s21 = sadd.s32 1, %s16
    %p22 = scmp.ge.s32.totalorder %s21, 1
    %s23 = scalar_select %p22, 0, %s21
    %s24 = sadd.s32 1, %s15
    %s25 = scalar_select %p22, %s24, %s15
    %p26 = scmp.ge.s32.totalorder %s25, 2
    %s27 = scalar_select %p26, 0, %s25
    %s28 = ssub.s32 %s15, %s27
    %s29 = ssub.s32 %s16, %s23
    %s30 = sor.u32 %s28, %s29
    %p31 = scmp.eq.s32.totalorder %s30, 0
    %s33 = sadd.s32 %s32, 1
    %s34 = scalar_select %p31, %s32, %s33
    %p37 = pneg %p31
    %p38 = scmp.eq.s32.totalorder %s8, 1
    %p39 = por %p37, %p38
    %p40 = scmp.ne.s32.totalorder %s32, %s35
    %p41 = scmp.eq.s32.totalorder %s8, 0
    %p42 = por %p40, %p41
    %p43 = scmp.ne.s32.totalorder %s32, %s35
    %p44 = scmp.eq.s32.totalorder %s13, 1
    %p45 = por %p43, %p44
    %p46 = scmp.ne.s32.totalorder %s35, %s36
    %p47 = scmp.eq.s32.totalorder %s13, 0
    %p48 = por %p46, %p47
    %p49 = scmp.ne.s32.totalorder %s35, %s36
    %p50 = scmp.eq.s32.totalorder %s14, 1
    %p51 = por %p49, %p50
    %p53 = scmp.ne.s32.totalorder %s36, %s52
    %p54 = scmp.eq.s32.totalorder %s14, 0
    %p55 = por %p53, %p54
    %s57 = sadd.s32 %s56, 1
    %p60 = scmp.eq.s32.totalorder %s8, 1
    %p61 = scmp.ne.s32.totalorder %s56, %s58
    %p62 = scmp.eq.s32.totalorder %s8, 0
    %p63 = por %p61, %p62
    %p64 = scmp.ne.s32.totalorder %s56, %s58
    %p65 = scmp.eq.s32.totalorder %s13, 1
    %p66 = por %p64, %p65
    %p67 = scmp.ne.s32.totalorder %s58, %s59
    %p68 = scmp.eq.s32.totalorder %s13, 0
    %p69 = por %p67, %p68
    %p70 = scmp.ne.s32.totalorder %s58, %s59
    %p71 = scmp.eq.s32.totalorder %s14, 1
    %p72 = por %p70, %p71
    %p74 = scmp.ne.s32.totalorder %s59, %s73
    %p75 = scmp.eq.s32.totalorder %s14, 0
    %p76 = por %p74, %p75
    %s77 = ssub.s32 %s15, %s27
    %s78 = ssub.s32 %s16, %s23
    %s79 = sor.u32 %s77, %s78
    %p80 = scmp.eq.s32.totalorder %s79, 0
    %s82 = sadd.s32 %s81, 1
    %s83 = scalar_select %p80, %s81, %s82
    %p86 = pneg %p80
    %p87 = scmp.eq.s32.totalorder %s8, 1
    %p88 = por %p86, %p87
    %p89 = scmp.ne.s32.totalorder %s81, %s84
    %p90 = scmp.eq.s32.totalorder %s8, 0
    %p91 = por %p89, %p90
    %p92 = scmp.ne.s32.totalorder %s81, %s84
    %p93 = scmp.eq.s32.totalorder %s13, 1
    %p94 = por %p92, %p93
    %p95 = scmp.ne.s32.totalorder %s84, %s85
    %p96 = scmp.eq.s32.totalorder %s13, 0
    %p97 = por %p95, %p96
    %p98 = scmp.ne.s32.totalorder %s84, %s85
    %p99 = scmp.eq.s32.totalorder %s14, 1
    %p100 = por %p98, %p99
    %p102 = scmp.ne.s32.totalorder %s85, %s101
    %p103 = scmp.eq.s32.totalorder %s14, 0
    %p104 = por %p102, %p103
    %p105 = scmp.le.s32.totalorder 1, %s8
    %p106 = scmp.lt.s32.totalorder %s8, 3
    %p107 = pnand %p105, %p106
    %p108 = pneg %p107
    // Predicated region
    $region9: #{psr_basic_stem_forward.1} parent=5 // pred_check
      _
    $region10: #{psr_basic_stem_forward.1} parent=5 // pred_check_branch
      %110 = sbr.rel (%p107) target = $region12
    $region11: #{psr_basic_stem_forward.1} parent=5 // pred_region
      %s111 = ssub.s32 %s8, 1
      // Predicated region
      $region13: #{psr_basic_stem_forward.1} parent=11 // pred_check
        %p112 = pneg %p69
      $region14: #{psr_basic_stem_forward.1} parent=11 // pred_check_branch
        %114 = sbr.rel (%p112) target = $region16
      $region15: #{psr_basic_stem_forward.1} parent=11 // pred_region
        _
      $region16: #{psr_basic_stem_forward.1} parent=11 // pred_fallthru
        _
    $region12: #{psr_basic_stem_forward.1} parent=5 // pred_fallthru
      _
    %p115 = scmp.lt.s32.totalorder %s8, 2
    // Predicated region
    $region17: #{psr_basic_stem_forward.1} parent=5 // pred_check
      %p116 = pneg %p115
    $region18: #{psr_basic_stem_forward.1} parent=5 // pred_check_branch
      %118 = sbr.rel (%p116) target = $region20
    $region19: #{psr_basic_stem_forward.1} parent=5 // pred_region
      // Predicated region
      $region21: #{psr_basic_stem_forward.1} parent=19 // pred_check
        %p119 = pneg %p42
      $region22: #{psr_basic_stem_forward.1} parent=19 // pred_check_branch
        %121 = sbr.rel (%p119) target = $region24
      $region23: #{psr_basic_stem_forward.1} parent=19 // pred_region
        %s122 = smul.u32 9, %s16
        %p123 = scmp.lt.s32.totalorder %s15, 1
        %s124 = scalar_select %p123, %s15, 1
        %p125 = scmp.lt.s32.totalorder %s122, 8
        %s126 = scalar_select %p125, %s122, 8
        %s127 = smul.addr %s126, 2
        %s128 = smul.addr %s124, 18
        %s129 = sadd.s32 %s127, %s128
        %s130 = smul.addr %s129, 4
        %s131 = scalar_lea.vmem %s0, %s130
        %s132 = smul.u32 9, %s16
      $region24: #{psr_basic_stem_forward.1} parent=19 // pred_fallthru
        _
    $region20: #{psr_basic_stem_forward.1} parent=5 // pred_fallthru
      _
    %p133 = scmp.le.s32.totalorder 1, %s8
    %p134 = scmp.lt.s32.totalorder %s8, 3
    %p135 = pnand %p133, %p134
    %p136 = pneg %p135
    // Predicated region
    $region25: #{psr_basic_stem_forward.1} parent=5 // pred_check
      _
    $region26: #{psr_basic_stem_forward.1} parent=5 // pred_check_branch
      %138 = sbr.rel (%p135) target = $region28
    $region27: #{psr_basic_stem_forward.1} parent=5 // pred_region
      %s139 = ssub.s32 %s8, 1
      %s140 = smul.u32 9, %s18
      %p141 = scmp.lt.s32.totalorder %s17, 1
      %s142 = scalar_select %p141, %s17, 1
      %p143 = scmp.lt.s32.totalorder %s140, 8
      %s144 = scalar_select %p143, %s140, 8
      %s145 = smul.addr %s144, 2
      %s146 = smul.addr %s142, 18
      %s147 = sadd.s32 %s145, %s146
      %s148 = smul.addr %s147, 4
      %s149 = scalar_lea.vmem %s0, %s148
      %p150 = pneg %p48
      %p151 = pneg %p45
      %p152 = pneg %p69
      %p153 = pneg %p66
      %p154 = pneg %p97
      %p155 = pneg %p94
      %s156 = smul.u32 4, %s18
      %p157 = scmp.lt.s32.totalorder %s17, 1
      %s158 = scalar_select %p157, %s17, 1
      %p159 = scmp.lt.s32.totalorder %s156, 3
      %s160 = scalar_select %p159, %s156, 3
      %s161 = smul.addr %s158, 4
      %s162 = sadd.s32 %s160, %s161
      %s163 = smul.addr %s162, 4
      %s164 = scalar_lea.vmem %s2, %s163
      %s165 = smul.u32 9, %s18
      %p166 = scmp.lt.s32.totalorder %s17, 1
      %s167 = scalar_select %p166, %s17, 1
      %p168 = scmp.lt.s32.totalorder %s165, 8
      %s169 = scalar_select %p168, %s165, 8
      %s170 = smul.addr %s169, 2
      %s171 = smul.addr %s167, 18
      %s172 = sadd.s32 %s170, %s171
      %s173 = smul.addr %s172, 4
      %s174 = scalar_lea.vmem %s0, %s173
      %s175 = smul.u32 9, %s18
      %s176 = smul.u32 4, %s18
      %p177 = scmp.lt.s32.totalorder %s17, 1
      %s178 = scalar_select %p177, %s17, 1
      %p179 = scmp.lt.s32.totalorder %s176, 3
      %s180 = scalar_select %p179, %s176, 3
      %s181 = smul.addr %s178, 4
      %s182 = sadd.s32 %s180, %s181
      %s183 = smul.addr %s182, 4
      %s184 = scalar_lea.vmem %s2, %s183
      %s185 = smul.u32 4, %s18
      %v187 = vld [vmem:[%s174] sm:$0xff]
      %v188 = vld [vmem:[%s174 + $0x8] sm:$0xff]
      %v189 = vld [vmem:[%s174 + $0x10] sm:$0xff]
      %v190 = vld [vmem:[%s174 + $0x18] sm:$0xff]
      %v191 = vld [vmem:[%s174 + $0x20] sm:$0xff]
      %v192 = vld [vmem:[%s174 + $0x28] sm:$0xff]
      %v193 = vld [vmem:[%s174 + $0x30] sm:$0xff]
      %v194 = vld [vmem:[%s174 + $0x38] sm:$0xff]
      %v195 = vld [vmem:[%s174 + $0x40] sm:$0xff]
      %v196 = vld [vmem:[%s1] sm:$0xf]
      %v197 = vld [vmem:[%s1 + $0x4] sm:$0xf]
      %v198 = vld [vmem:[%s1 + $0x8] sm:$0xf]
      %v199 = vld [vmem:[%s1 + $0xc] sm:$0xf]
      %v200 = vld [vmem:[%s1 + $0x10] sm:$0xf]
      %v201 = vld [vmem:[%s1 + $0x14] sm:$0xf]
      %v202 = vld [vmem:[%s1 + $0x18] sm:$0xf]
      %v203 = vld [vmem:[%s1 + $0x1c] sm:$0xf]
      %v204 = vld [vmem:[%s1 + $0x20] sm:$0xf]
      %v205 = vld [vmem:[%s1 + $0x24] sm:$0xf]
      %v206 = vld [vmem:[%s1 + $0x28] sm:$0xf]
      %v207 = vld [vmem:[%s1 + $0x2c] sm:$0xf]
      %v208 = vld [vmem:[%s1 + $0x30] sm:$0xf]
      %v209 = vld [vmem:[%s1 + $0x34] sm:$0xf]
      %v210 = vld [vmem:[%s1 + $0x38] sm:$0xf]
      %v211 = vld [vmem:[%s1 + $0x3c] sm:$0xf]
      %v212 = vld [vmem:[%s1 + $0x40] sm:$0xf]
      %v213 = vld [vmem:[%s1 + $0x44] sm:$0xf]
      %v214 = vld [vmem:[%s1 + $0x48] sm:$0xf]
      %v215 = vld [vmem:[%s1 + $0x4c] sm:$0xf]
      %v216 = vld [vmem:[%s1 + $0x50] sm:$0xf]
      %v217 = vld [vmem:[%s1 + $0x54] sm:$0xf]
      %v218 = vld [vmem:[%s1 + $0x58] sm:$0xf]
      %v219 = vld [vmem:[%s1 + $0x5c] sm:$0xf]
      %v229 = vunpack.c.l.b16 %v187
      %v230 = vunpack.c.h.b16 %v187
      %v231 = vunpack.c.l.b16 %v188
      %v232 = vunpack.c.h.b16 %v188
      %v233 = vunpack.c.l.b16 %v189
      %v234 = vunpack.c.h.b16 %v189
      %v235 = vunpack.c.l.b16 %v190
      %v236 = vunpack.c.h.b16 %v190
      %v237 = vunpack.c.l.b16 %v191
      %v238 = vunpack.c.h.b16 %v191
      %v239 = vunpack.c.l.b16 %v192
      %v240 = vunpack.c.h.b16 %v192
      %v241 = vunpack.c.l.b16 %v193
      %v242 = vunpack.c.h.b16 %v193
      %v243 = vunpack.c.l.b16 %v194
      %v244 = vunpack.c.h.b16 %v194
      %v245 = vunpack.c.l.b16 %v195
      %v246 = vunpack.c.h.b16 %v195
      %v247 = vpack.c.b16 %v231, %v229
      %v248 = vpack.c.b16 %v232, %v230
      %v249 = vpack.c.b16 %v235, %v233
      %v250 = vpack.c.b16 %v236, %v234
      %v251 = vpack.c.b16 %v239, %v237
      %v252 = vpack.c.b16 %v240, %v238
      %v253 = vpack.c.b16 %v243, %v241
      %v254 = vpack.c.b16 %v244, %v242
      %v255 = vpack.c.b16 %v245, %v245
      %v256 = vpack.c.b16 %v246, %v246
      %v286 = vunpack.c.l.b16 %v196
      %v287 = vunpack.c.l.b16 %v197
      %v288 = vunpack.c.l.b16 %v198
      %v289 = vunpack.c.l.b16 %v199
      %v290 = vunpack.c.l.b16 %v200
      %v291 = vunpack.c.l.b16 %v201
      %v292 = vunpack.c.l.b16 %v202
      %v293 = vunpack.c.l.b16 %v203
      %v294 = vunpack.c.l.b16 %v204
      %v295 = vunpack.c.l.b16 %v205
      %v296 = vunpack.c.l.b16 %v206
      %v297 = vunpack.c.l.b16 %v207
      %v298 = vunpack.c.l.b16 %v208
      %v299 = vunpack.c.l.b16 %v209
      %v300 = vunpack.c.l.b16 %v210
      %v301 = vunpack.c.l.b16 %v211
      %v302 = vunpack.c.l.b16 %v212
      %v303 = vunpack.c.l.b16 %v213
      %v304 = vunpack.c.l.b16 %v214
      %v305 = vunpack.c.l.b16 %v215
      %v306 = vunpack.c.l.b16 %v216
      %v307 = vunpack.c.l.b16 %v217
      %v308 = vunpack.c.l.b16 %v218
      %v309 = vunpack.c.l.b16 %v219
      %v310 = vpack.c.b16 %v287, %v286
      %v311 = vpack.c.b16 %v289, %v288
      %v312 = vpack.c.b16 %v291, %v290
      %v313 = vpack.c.b16 %v293, %v292
      %v314 = vpack.c.b16 %v295, %v294
      %v315 = vpack.c.b16 %v297, %v296
      %v316 = vpack.c.b16 %v299, %v298
      %v317 = vpack.c.b16 %v301, %v300
      %v318 = vpack.c.b16 %v303, %v302
      %v319 = vpack.c.b16 %v305, %v304
      %v320 = vpack.c.b16 %v307, %v306
      %v321 = vpack.c.b16 %v309, %v308
      %vm333 = vcmask 515072
      %v335 = vsel %vm333, %v248, 0
      %v338 = vsel %vm333, %v250, 0
      %v341 = vsel %vm333, %v252, 0
      %v344 = vsel %vm333, %v254, 0
      %v347 = vsel %vm333, %v256, 0
      %vm349 = vcmask 1046528
      %vm350 = vcmask 1047552
      %v351 = vsel %vm349, 4294967295, 65535
      %v352 = vsel %vm350, %v351, 0
      %v354 = vand.u32 %v321, %v352
      %356 = vmatprep.subr.bf16.mxu0 0
      %357 = vmatpush1.bf16.msra.mxu0 %v317
      %358 = vmatprep.subr.bf16.mxu0 0
      %359 = vmatpush1.bf16.msra.mxu0 %v316
      %360 = vmatprep.subr.bf16.mxu0 0
      %361 = vmatpush1.bf16.msra.mxu0 %v315
      %362 = vmatprep.subr.bf16.mxu0 0
      %363 = vmatpush1.bf16.msra.mxu0 %v314
      %364 = vmatprep.subr.bf16.mxu0 0
      %365 = vmatpush1.bf16.msra.mxu0 %v313
      %366 = vmatprep.subr.bf16.mxu0 0
      %367 = vmatpush1.bf16.msra.mxu0 %v312
      %368 = vmatprep.subr.bf16.mxu0 0
      %369 = vmatpush1.bf16.msra.mxu0 %v311
      %370 = vmatprep.subr.bf16.mxu0 0
      %371 = vmatpush1.bf16.msra.mxu0 %v310
      %372 = vmatprep.subr.bf16.mxu0 0
      %373 = vmatpush2.bf16.msra.mxu0 0
      %374 = vmatprep.subr.bf16.mxu0 0
      %375 = vmatpush2.bf16.msra.mxu0 0
      %376 = vmatprep.subr.bf16.mxu0 0
      %377 = vmatpush2.bf16.msra.mxu0 0
      %378 = vmatprep.subr.bf16.mxu0 0
      %379 = vmatpush2.bf16.msra.mxu0 0
      %380 = vmatprep.subr.bf16.mxu0 0
      %381 = vmatpush2.bf16.msra.mxu0 %v354
      %382 = vmatprep.subr.bf16.mxu0 0
      %383 = vmatpush2.bf16.msra.mxu0 %v320
      %384 = vmatprep.subr.bf16.mxu0 0
      %385 = vmatpush2.bf16.msra.mxu0 %v319
      %386 = vmatprep.subr.bf16.mxu0 0
      %387 = vmatpush2.bf16.msra.mxu0 %v318
      %388 = vmatprep.mubr.bf16.mxu0 %v335
      %389 = vmatmul.mubr.bf16.gmra.mxu0 %v247
      %v390 = vpop.f32.mrf.mxu0
      %v391 = vadd.f32 0.0, %v390
      %v392 = vpop.f32.mrf.mxu0
      %v393 = vpop.f32.mrf.mxu0
      %v394 = vadd.f32 0.0, %v393
      %v395 = vpop.f32.mrf.mxu0
      %396 = vmatprep.mubr.bf16.mxu0 %v338
      %397 = vmatmul.mubr.bf16.gmra.mxu0 %v249
      %v398 = vpop.f32.mrf.mxu0
      %v399 = vadd.f32 0.0, %v398
      %v400 = vpop.f32.mrf.mxu0
      %v401 = vpop.f32.mrf.mxu0
      %v402 = vadd.f32 0.0, %v401
      %v403 = vpop.f32.mrf.mxu0
      %404 = vmatprep.mubr.bf16.mxu0 %v341
      %405 = vmatmul.mubr.bf16.gmra.mxu0 %v251
      %v406 = vpop.f32.mrf.mxu0
      %v407 = vadd.f32 0.0, %v406
      %v408 = vpop.f32.mrf.mxu0
      %v409 = vpop.f32.mrf.mxu0
      %v410 = vadd.f32 0.0, %v409
      %v411 = vpop.f32.mrf.mxu0
      %412 = vmatprep.mubr.bf16.mxu0 %v344
      %413 = vmatmul.mubr.bf16.gmra.mxu0 %v253
      %v414 = vpop.f32.mrf.mxu0
      %v415 = vadd.f32 0.0, %v414
      %v416 = vpop.f32.mrf.mxu0
      %v417 = vpop.f32.mrf.mxu0
      %v418 = vadd.f32 0.0, %v417
      %v419 = vpop.f32.mrf.mxu0
      %420 = vmatprep.mubr.bf16.mxu0 %v347
      %421 = vmatmul.mubr.bf16.gmra.mxu0 %v255
      %v422 = vpop.f32.mrf.mxu0
      %v423 = vadd.f32 0.0, %v422
      %v424 = vpop.f32.mrf.mxu0
      %v425 = vpop.f32.mrf.mxu0
      %v426 = vpop.f32.mrf.mxu0
      %427 = vdwg.mxu0
      %v428 = vmax.f32 %v391, 0.0
      %v429 = vmax.f32 %v394, 0.0
      %v430 = vmax.f32 %v399, 0.0
      %v431 = vmax.f32 %v402, 0.0
      %v432 = vmax.f32 %v407, 0.0
      %v433 = vmax.f32 %v410, 0.0
      %v434 = vmax.f32 %v415, 0.0
      %v435 = vmax.f32 %v418, 0.0
      %v436 = vmax.f32 %v423, 0.0
      %446 = vrot.lane.b32.xlu0 %v428, 64
      %v447 = vpop.permute.xlu0 %446
      %448 = vrot.lane.b32.xlu0 %v429, 64
      %v449 = vpop.permute.xlu0 %448
      %450 = vrot.lane.b32.xlu0 %v430, 64
      %v451 = vpop.permute.xlu0 %450
      %452 = vrot.lane.b32.xlu0 %v431, 64
      %v453 = vpop.permute.xlu0 %452
      %454 = vrot.lane.b32.xlu0 %v432, 64
      %v455 = vpop.permute.xlu0 %454
      %456 = vrot.lane.b32.xlu0 %v433, 64
      %v457 = vpop.permute.xlu0 %456
      %458 = vrot.lane.b32.xlu0 %v434, 64
      %v459 = vpop.permute.xlu0 %458
      %460 = vrot.lane.b32.xlu0 %v435, 64
      %v461 = vpop.permute.xlu0 %460
      %462 = vrot.lane.b32.xlu0 %v436, 64
      %v463 = vpop.permute.xlu0 %462
      %v473 = vrot.slane %v447, 7
      %v474 = vrot.slane %v449, 7
      %v475 = vrot.slane %v451, 7
      %v476 = vrot.slane %v453, 7
      %v477 = vrot.slane %v455, 7
      %v478 = vrot.slane %v457, 7
      %v479 = vrot.slane %v459, 7
      %v480 = vrot.slane %v461, 7
      %v481 = vrot.slane %v463, 7
      %v482 = vmax.f32 %v428, %v447
      %v483 = vmax.f32 %v429, %v449
      %v484 = vmax.f32 %v430, %v451
      %v485 = vmax.f32 %v431, %v453
      %v486 = vmax.f32 %v432, %v455
      %v487 = vmax.f32 %v433, %v457
      %v488 = vmax.f32 %v434, %v459
      %v489 = vmax.f32 %v435, %v461
      %v490 = vmax.f32 %v436, %v463
      %v491 = vmax.f32 %v482, %v473
      %v492 = vmax.f32 %v483, %v474
      %v493 = vmax.f32 %v484, %v475
      %v494 = vmax.f32 %v485, %v476
      %v495 = vmax.f32 %v486, %v477
      %v496 = vmax.f32 %v487, %v478
      %v497 = vmax.f32 %v488, %v479
      %v498 = vmax.f32 %v489, %v480
      %v499 = vmax.f32 %v490, %v481
      %v500 = vmax.f32 %v491, %v492
      %v501 = vmax.f32 %v493, %v494
      %v502 = vmax.f32 %v495, %v496
      %v503 = vmax.f32 %v497, %v498
      %v504 = vmax.f32 %v500, %v493
      %v505 = vmax.f32 %v501, %v495
      %v506 = vmax.f32 %v502, %v497
      %v507 = vmax.f32 %v503, %v499
      %v512 = vrot.slane %v504, 4
      %v513 = vrot.slane %v505, 4
      %v514 = vrot.slane %v506, 4
      %v515 = vrot.slane %v507, 4
      %516 = vrot.lane.b32.xlu0 %v512, 64
      %v517 = vpop.permute.xlu0 %516
      %518 = vrot.lane.b32.xlu0 %v513, 64
      %v519 = vpop.permute.xlu0 %518
      %520 = vrot.lane.b32.xlu0 %v514, 64
      %v521 = vpop.permute.xlu0 %520
      %522 = vrot.lane.b32.xlu0 %v515, 64
      %v523 = vpop.permute.xlu0 %522
      %vm528 = vcmask 523264
      %v529 = vsel %vm528, %v504, %v517
      %v530 = vsel %vm528, %v505, %v519
      %v531 = vsel %vm528, %v506, %v521
      %v532 = vsel %vm528, %v507, %v523
      %533 = vst [vmem:[%s184] sm:$0xf] %v529
      %534 = vst [vmem:[%s184 + $0x4] sm:$0xf] %v530
      %535 = vst [vmem:[%s184 + $0x8] sm:$0xf] %v531
      %536 = vst [vmem:[%s184 + $0xc] sm:$0xf] %v532
      %s537 = smul.u32 4, %s18
      %p538 = scmp.lt.s32.totalorder %s17, 1
      %s539 = scalar_select %p538, %s17, 1
      %p540 = scmp.lt.s32.totalorder %s537, 3
      %s541 = scalar_select %p540, %s537, 3
      %s542 = smul.addr %s539, 4
      %s543 = sadd.s32 %s541, %s542
      %s544 = smul.addr %s543, 4
      %s545 = scalar_lea.vmem %s2, %s544
      // Predicated region
      $region29: #{psr_basic_stem_forward.1} parent=27 // pred_check
        %p546 = pneg %p94
      $region30: #{psr_basic_stem_forward.1} parent=27 // pred_check_branch
        %548 = sbr.rel (%p546) target = $region32
      $region31: #{psr_basic_stem_forward.1} parent=27 // pred_region
        %s549 = smul.u32 4, %s18
      $region32: #{psr_basic_stem_forward.1} parent=27 // pred_fallthru
        _
    $region28: #{psr_basic_stem_forward.1} parent=5 // pred_fallthru
      _
    %p550 = scmp.le.s32.totalorder 2, %s8
    // Predicated region
    $region33: #{psr_basic_stem_forward.1} parent=5 // pred_check
      %p551 = pneg %p550
    $region34: #{psr_basic_stem_forward.1} parent=5 // pred_check_branch
      %553 = sbr.rel (%p551) target = $region36
    $region35: #{psr_basic_stem_forward.1} parent=5 // pred_region
      %s554 = ssub.s32 %s8, 2
      // Predicated region
      $region37: #{psr_basic_stem_forward.1} parent=35 // pred_check
        %p555 = pneg %p100
      $region38: #{psr_basic_stem_forward.1} parent=35 // pred_check_branch
        %557 = sbr.rel (%p555) target = $region40
      $region39: #{psr_basic_stem_forward.1} parent=35 // pred_region
        %s558 = smul.u32 4, %s20
        %p559 = scmp.lt.s32.totalorder %s19, 1
        %s560 = scalar_select %p559, %s19, 1
        %p561 = scmp.lt.s32.totalorder %s558, 3
        %s562 = scalar_select %p561, %s558, 3
        %s563 = smul.addr %s560, 4
        %s564 = sadd.s32 %s562, %s563
        %s565 = smul.addr %s564, 4
        %s566 = scalar_lea.vmem %s2, %s565
      $region40: #{psr_basic_stem_forward.1} parent=35 // pred_fallthru
        _
    $region36: #{psr_basic_stem_forward.1} parent=5 // pred_fallthru
      _
  $region6: #{psr_basic_stem_forward.1} parent=0 // loop_footer
    %s12 = sadd.s32 1, %s8
  $region7: #{psr_basic_stem_forward.1} parent=0 // loop_footer_branch
    %7 = sbr.rel target = $region3
  $region8: #{psr_basic_stem_forward.1} parent=0 // loop_exit
    _

</llo_original>
